<compile_context>
chip_gen: v7x
topology: tpu7x:2x2x1
jax: 0.10.0
libtpu: 0.0.40
codegen_flags: <defaults>
</compile_context>

<pallas_src>
import jax
import jax.numpy as jnp
from jax.experimental import pallas as pl
from jax.experimental.pallas import tpu as pltpu

_LANE_WIDTH = 1024              # 8 full vregs wide -> unmasked, lane-dense stores
_TARGET_TILE_BYTES = 2 << 20    # ~2 MiB per tile; 4 double-buffered tiles ~8 MiB VMEM


def _identity_kernel(x_ref, o_ref):
    # Hot path: whole-tile VMEM load + store (pure pass-through).
    o_ref[...] = x_ref[...]


def _choose_layout(total_elems, dtype):
    """Pick a lane-dense (rows, 1024) layout and a dtype-legal tile height."""
    itemsize = jnp.dtype(dtype).itemsize
    w = _LANE_WIDTH
    # Minimum sublane tile: f32 -> 8, bf16 -> 16, int8/fp8 -> 32.
    min_sub = max(8, 32 // itemsize)
    tile_rows = max(min_sub,
                    (_TARGET_TILE_BYTES // (w * itemsize)) // min_sub * min_sub)
    rows_needed = pl.cdiv(max(total_elems, 1), w)
    if rows_needed <= tile_rows:
        # Tiny input: shrink the tile so we don't pad far past the data.
        tile_rows = max(min_sub, pl.cdiv(rows_needed, min_sub) * min_sub)
    block_elems = tile_rows * w
    padded_total = pl.cdiv(max(total_elems, 1), block_elems) * block_elems
    rows = padded_total // w
    return w, tile_rows, rows, padded_total


def _identity_copy_2d(x2d, tile_rows):
    """Tiled identity over a lane-dense (R, 1024) array; R % tile_rows == 0."""
    r, w = x2d.shape
    assert r % tile_rows == 0
    grid = (r // tile_rows,)
    return pl.pallas_call(
        _identity_kernel,
        out_shape=jax.ShapeDtypeStruct((r, w), x2d.dtype),
        grid_spec=pltpu.PrefetchScalarGridSpec(
            num_scalar_prefetch=0,
            grid=grid,
            in_specs=[pl.BlockSpec((tile_rows, w), lambda i: (i, 0))],
            out_specs=pl.BlockSpec((tile_rows, w), lambda i: (i, 0)),
        ),
        input_output_aliases={0: 0},  # identity: reuse the (padded) input buffer
        compiler_params=pltpu.CompilerParams(
            dimension_semantics=("parallel",),
        ),
    )(x2d)


def _identity_forward(x):
    """Identity forward pass routed through a lane-dense Pallas copy kernel."""
    orig_shape = x.shape
    total = int(x.size)
    w, tile_rows, rows, padded_total = _choose_layout(total, x.dtype)

    flat = x.reshape(total)
    pad = padded_total - total
    if pad:
        flat = jnp.pad(flat, (0, pad))
    x2d = flat.reshape(rows, w)

    y2d = _identity_copy_2d(x2d, tile_rows)

    y = y2d.reshape(padded_total)[:total].reshape(orig_shape)
    return y


class BaseModelPallas:
    """JAX/Pallas counterpart of the PyTorch BaseModel (abstract base)."""

    def __init__(self):
        # BaseModel.__init__ registers no parameters.
        self.params = {}
        self._forward = jax.jit(_identity_forward)

    def forward(self, x):
        # layout: NCHW in, NCHW out.  Identity pass-through via a Pallas kernel.
        return self._forward(x)

    def get_model_name(self):
        return self.__class__.__name__

    def count_parameters(self):
        return sum(int(p.size) for p in jax.tree_util.tree_leaves(self.params))


if __name__ == "__main__":
    key = jax.random.PRNGKey(0)
    # Small NCHW input consistent with typical vision model forward signatures.
    x = jax.random.normal(key, (2, 4, 16, 16), dtype=jnp.float32)

    model = BaseModelPallas()
    y = model.forward(x)
    y = jax.block_until_ready(y)

    assert y.shape == x.shape and y.dtype == x.dtype
    assert bool(jnp.allclose(y, x))
    assert model.count_parameters() == 0
    assert model.get_model_name() == "BaseModelPallas"

    print("KERNEL_OK")
</pallas_src>

<mosaic_0001>
module attributes {stable_mosaic.version = 11 : i64} {
  func.func @_identity_kernel(%arg0: i32, %arg1: memref<8x1024xf32, #tpu.memory_space<vmem>>, %arg2: memref<8x1024xf32, #tpu.memory_space<vmem>>) attributes {dimension_semantics = [#tpu.dimension_semantics<parallel>], iteration_bounds = array<i64: 1>, scalar_prefetch = 0 : i64, scratch_operands = 0 : i64, tpu.core_type = #tpu.core_type<tc>, window_params = [{transform_indices = @transform_0, window_bounds = array<i64: 8, 1024>}, {transform_indices = @transform_1, window_bounds = array<i64: 8, 1024>}]} {
    %c0 = arith.constant 0 : index
    %c0_0 = arith.constant 0 : index
    %0 = vector.load %arg1[%c0, %c0_0] : memref<8x1024xf32, #tpu.memory_space<vmem>>, vector<8x1024xf32>
    %c0_1 = arith.constant 0 : index
    %c0_2 = arith.constant 0 : index
    %1 = vector.load %arg2[%c0_1, %c0_2] : memref<8x1024xf32, #tpu.memory_space<vmem>>, vector<8x1024xf32>
    tpu.vector_store %arg2[%c0_1, %c0_2], %0 {strides = array<i32>} : memref<8x1024xf32, #tpu.memory_space<vmem>>, vector<8x1024xf32>,
    return
  }
  func.func @transform_0(%arg0: i32) -> (i32, i32) {
    %c0_i32 = arith.constant 0 : i32
    %c0_i32_0 = arith.constant 0 : i32
    return %arg0, %c0_i32 : i32, i32
  }
  func.func @transform_1(%arg0: i32) -> (i32, i32) {
    %c0_i32 = arith.constant 0 : i32
    %c0_i32_0 = arith.constant 0 : i32
    return %arg0, %c0_i32 : i32, i32
  }
}

</mosaic_0001>

<llo_original>
// kernel: _identity_forward.1
$region0: #{_identity_forward.1}
  #allocation0 [shape = 'u32[]', space=smem, size = 0x4, offset = 0x4, fixed_abs, tag = 'smem constant byte address 0x4 - core index']
  #allocation1 [shape = 'u32[144,128]{1,0:T(1,128)}', space=vmem, size = 0x12000, scoped, tag = 'internal scratch']
  %s0 = inlined_call_operand.vmem [shape: f32[8,1024], index: 0, kind: input, shape index: {}, may-alias: {0,1}]
  %s1 = inlined_call_operand.vmem [shape: f32[8,1024], index: 1, kind: output, shape index: {}, may-alias: {0,1}]
  %s2 = sld [smem:[#allocation0]]
  $region14: #{_identity_forward.1} parent=0
    _
  %s4 = ssub.s32 1, %s2
  %s5 = scalar_select 0, %s4, %s2
  // Predicated region
  $region2: #{_identity_forward.1} parent=0 // pred_check
    _
  $region3: #{_identity_forward.1} parent=0 // pred_check_branch
    %7 = sbr.rel (0) target = $region5
  $region4: #{_identity_forward.1} parent=0 // pred_region
    _
  $region5: #{_identity_forward.1} parent=0 // pred_fallthru
    _
  %v8 = vld [vmem:[%s0] sm:$0xff]
  %v9 = vld [vmem:[%s0 + $0x8] sm:$0xff]
  %v10 = vld [vmem:[%s0 + $0x10] sm:$0xff]
  %v11 = vld [vmem:[%s0 + $0x18] sm:$0xff]
  %v12 = vld [vmem:[%s0 + $0x20] sm:$0xff]
  %v13 = vld [vmem:[%s0 + $0x28] sm:$0xff]
  %v14 = vld [vmem:[%s0 + $0x30] sm:$0xff]
  %v15 = vld [vmem:[%s0 + $0x38] sm:$0xff]
  %16 = vst [vmem:[%s1] sm:$0xff] %v8
  %17 = vst [vmem:[%s1 + $0x8] sm:$0xff] %v9
  %18 = vst [vmem:[%s1 + $0x10] sm:$0xff] %v10
  %19 = vst [vmem:[%s1 + $0x18] sm:$0xff] %v11
  %20 = vst [vmem:[%s1 + $0x20] sm:$0xff] %v12
  %21 = vst [vmem:[%s1 + $0x28] sm:$0xff] %v13
  %22 = vst [vmem:[%s1 + $0x30] sm:$0xff] %v14
  %23 = vst [vmem:[%s1 + $0x38] sm:$0xff] %v15
  // Predicated region
  $region6: #{_identity_forward.1} parent=0 // pred_check
    _
  $region7: #{_identity_forward.1} parent=0 // pred_check_branch
    %25 = sbr.rel (0) target = $region9
  $region8: #{_identity_forward.1} parent=0 // pred_region
    _
  $region9: #{_identity_forward.1} parent=0 // pred_fallthru
    _
  // Predicated region
  $region10: #{_identity_forward.1} parent=0 // pred_check
    _
  $region11: #{_identity_forward.1} parent=0 // pred_check_branch
    %27 = sbr.rel (0) target = $region13
  $region12: #{_identity_forward.1} parent=0 // pred_region
    _
  $region13: #{_identity_forward.1} parent=0 // pred_fallthru
    _

</llo_original>
